<compile_context>
chip_gen: v7x
topology: tpu7x:2x2x1
jax: 0.10.0
libtpu: 0.0.40
codegen_flags: <defaults>
</compile_context>

<pallas_src>
import jax
import jax.numpy as jnp
from jax.experimental import pallas as pl
from jax.experimental.pallas import tpu as pltpu


def _physics_loss_kernel(obs_ref, prd_ref, mask_ref, out_ref):
    BB = prd_ref.shape[0]
    H, W = prd_ref.shape[2], prd_ref.shape[3]

    obs = obs_ref[...].astype(jnp.float32)   # (BB, 3, H, W)
    prd = prd_ref[...].astype(jnp.float32)   # (BB, 3, H, W)
    mask = mask_ref[...]                     # (H, W) f32 interior mask (constant block)

    # --- observation error, summed over channels and this step's samples ---
    e_b = (jnp.abs(obs[:, 0] - prd[:, 0])
           + jnp.abs(obs[:, 1] - prd[:, 1])
           + jnp.abs(obs[:, 2] - prd[:, 2]))          # (BB, H, W)
    e_hw = jnp.sum(e_b, axis=0) * mask                # (H, W), interior only

    # --- physics (divergence) term on the interior ---
    u = prd[:, 0]                                     # (BB, H, W)
    v = prd[:, 1]                                     # (BB, H, W)
    d_sic = prd[:, 2, 1:-1, 1:-1]                     # (BB, H-2, W-2)
    dy = v[:, 2:, 1:-1] - v[:, :-2, 1:-1]             # (BB, H-2, W-2)
    dx = u[:, 1:-1, 2:] - u[:, 1:-1, :-2]             # (BB, H-2, W-2)
    div = dx + dy
    phy = jnp.where((div > 0.03) & (d_sic > 0.1), div * d_sic, jnp.float32(0.0))
    phy_s = jnp.sum(jnp.sum(phy, axis=0))             # one small per-step reduction

    # --- lane-aligned (8, W) partial-sum slab (error + 10 * physics) ---
    def fold_rows(x):
        """(H, W) -> (8, W) partial sums, preserving the total (aligned VPU adds)."""
        if H % 8 == 0:
            parts = [x[k * 8:(k + 1) * 8, :] for k in range(H // 8)]
            while len(parts) > 1:                     # pairwise tree fold
                nxt = [parts[i] + parts[i + 1] for i in range(0, len(parts) - 1, 2)]
                if len(parts) % 2:
                    nxt.append(parts[-1])
                parts = nxt
            return parts[0]
        # Fallback when H is not a multiple of 8: one reduction placed at [0, 0].
        rr = jax.lax.broadcasted_iota(jnp.int32, (8, W), 0)
        cc = jax.lax.broadcasted_iota(jnp.int32, (8, W), 1)
        return jnp.where((rr == 0) & (cc == 0), jnp.sum(x), jnp.float32(0.0))

    slab = fold_rows(e_hw)
    r8 = jax.lax.broadcasted_iota(jnp.int32, (8, W), 0)
    c8 = jax.lax.broadcasted_iota(jnp.int32, (8, W), 1)
    out_ref[...] = slab + jnp.where((r8 == 0) & (c8 == 0),
                                    jnp.float32(10.0) * phy_s, jnp.float32(0.0))


def _vmem_capacity_bytes() -> int:
    """Generation-specific physical VMEM per TensorCore (64 MiB v7x, 128 MiB v5e/v6e)."""
    try:
        info = pltpu.get_tpu_info()
        cap = getattr(info, "vmem_capacity_bytes", None)
        if cap:
            return int(cap)
    except Exception:
        pass
    return 64 << 20  # conservative default (fits every generation)


def physics_loss(obs, prd):
    """JAX/Pallas equivalent of the PyTorch physics_loss.forward(obs, prd)."""
    B, C, H, W = obs.shape
    assert prd.shape == obs.shape and C >= 3 and H >= 3 and W >= 3

    itemsize = max(jnp.dtype(obs.dtype).itemsize, jnp.dtype(prd.dtype).itemsize)

    # ---- choose samples-per-step (BB) from HBM-roofline and VMEM budgets ----
    per_sample_in = 3 * H * W * itemsize                 # one array, one sample
    # double-buffered input blocks (2 arrays x 2 buffers) + in-kernel f32 temporaries
    per_sample_vmem = 2 * 2 * per_sample_in + 16 * H * W * 4
    cap = _vmem_capacity_bytes()
    budget = max(8 << 20, int(cap * 0.45))               # leave headroom for the compiler
    bb_vmem = max(1, budget // per_sample_vmem)
    bb_dma = max(1, (6 << 20) // max(1, 2 * per_sample_in))   # ~6 MiB per-step input block
    BB = int(min(B, bb_vmem, bb_dma))

    steps = int(pl.cdiv(B, BB))
    Bp = steps * BB
    if Bp != B:
        # Zero-padded samples contribute exactly 0 to both sums (|0-0|=0, div=0 -> masked).
        pad = ((0, Bp - B), (0, 0), (0, 0), (0, 0))
        obs = jnp.pad(obs, pad)
        prd = jnp.pad(prd, pad)

    # Interior mask built once on the host side; constant index_map keeps it VMEM-resident.
    row_ok = (jnp.arange(H) >= 1) & (jnp.arange(H) <= H - 2)
    col_ok = (jnp.arange(W) >= 1) & (jnp.arange(W) <= W - 2)
    mask = (row_ok[:, None] & col_ok[None, :]).astype(jnp.float32)

    vmem_limit = int(min(cap, max(BB * per_sample_vmem + (8 << 20), 16 << 20)))

    # TODO(synk): if production W < 128 and H > W, transpose the spatial axes in the
    # wrapper (swap the dx/dy difference axes in the kernel) so the longer axis maps
    # to the 128-lane dimension, and pad the output slab lane dim to a multiple of 128.
    parts = pl.pallas_call(
        _physics_loss_kernel,
        out_shape=jax.ShapeDtypeStruct((steps, 8, W), jnp.float32),
        grid_spec=pltpu.PrefetchScalarGridSpec(
            num_scalar_prefetch=0,
            grid=(steps,),
            in_specs=[
                pl.BlockSpec((BB, 3, H, W), lambda b: (b, 0, 0, 0)),
                pl.BlockSpec((BB, 3, H, W), lambda b: (b, 0, 0, 0)),
                pl.BlockSpec((H, W), lambda b: (0, 0)),   # constant -> no re-fetch
            ],
            out_specs=pl.BlockSpec((None, 8, W), lambda b: (b, 0, 0)),
        ),
        compiler_params=pltpu.CompilerParams(
            dimension_semantics=("parallel",),   # per-step partials, no resident accumulator
            vmem_limit_bytes=vmem_limit,
        ),
    )(obs, prd, mask)

    n_interior = jnp.float32(B * (H - 2) * (W - 2))
    total = jnp.sum(parts)                       # = sum(err) + 10 * sum(phy)
    return total / n_interior * jnp.float32(100.0)


def _physics_loss_ref(obs, prd):
    """Pure-JAX reference for validation (mirrors the PyTorch forward)."""
    err_u = jnp.abs(obs[:, 0, 1:-1, 1:-1] - prd[:, 0, 1:-1, 1:-1])
    err_v = jnp.abs(obs[:, 1, 1:-1, 1:-1] - prd[:, 1, 1:-1, 1:-1])
    err_s = jnp.abs(obs[:, 2, 1:-1, 1:-1] - prd[:, 2, 1:-1, 1:-1])
    err_sum = jnp.mean(err_u + err_v + err_s)
    u = prd[:, 0, :, :]
    v = prd[:, 1, :, :]
    d_sic = prd[:, 2, 1:-1, 1:-1]
    dy = v[:, 2:, 1:-1] - v[:, :-2, 1:-1]
    dx = u[:, 1:-1, 2:] - u[:, 1:-1, :-2]
    div = dx + dy
    err_phy = jnp.mean(jnp.where((div > 0.03) & (d_sic > 0.1), div * d_sic, 0.0))
    return (err_sum + 10.0 * err_phy) * 100.0


if __name__ == "__main__":
    key = jax.random.PRNGKey(0)
    k_obs, k_prd = jax.random.split(key)
    B, C, H, W = 2, 3, 16, 16
    obs = jax.random.uniform(k_obs, (B, C, H, W), dtype=jnp.float32)
    prd = jax.random.uniform(k_prd, (B, C, H, W), dtype=jnp.float32)

    out = jax.jit(physics_loss)(obs, prd)
    out = jax.block_until_ready(out)

    ref = _physics_loss_ref(obs, prd)
    assert jnp.allclose(out, ref, rtol=1e-5, atol=1e-5), (out, ref)

    print("KERNEL_OK")
</pallas_src>

<mosaic_0001>
module attributes {stable_mosaic.version = 11 : i64} {
  func.func @_physics_loss_kernel(%arg0: i32, %arg1: memref<2x3x16x16xf32, #tpu.memory_space<vmem>>, %arg2: memref<2x3x16x16xf32, #tpu.memory_space<vmem>>, %arg3: memref<16x16xf32, #tpu.memory_space<vmem>>, %arg4: memref<1x8x16xf32, #tpu.memory_space<vmem>>) attributes {dimension_semantics = [#tpu.dimension_semantics<parallel>], iteration_bounds = array<i64: 1>, scalar_prefetch = 0 : i64, scratch_operands = 0 : i64, tpu.core_type = #tpu.core_type<tc>, window_params = [{transform_indices = @transform_0, window_bounds = array<i64: 2, 3, 16, 16>}, {transform_indices = @transform_1, window_bounds = array<i64: 2, 3, 16, 16>}, {pipeline_mode = #tpu.pipeline_mode<synchronous>, transform_indices = @transform_2, window_bounds = array<i64: 16, 16>}, {transform_indices = @transform_3, window_bounds = array<i64: 1, 8, 16>}]} {
    %c0 = arith.constant 0 : index
    %c0_0 = arith.constant 0 : index
    %c0_1 = arith.constant 0 : index
    %c0_2 = arith.constant 0 : index
    %0 = vector.load %arg1[%c0, %c0_0, %c0_1, %c0_2] : memref<2x3x16x16xf32, #tpu.memory_space<vmem>>, vector<2x3x16x16xf32>
    %c0_3 = arith.constant 0 : index
    %c0_4 = arith.constant 0 : index
    %c0_5 = arith.constant 0 : index
    %c0_6 = arith.constant 0 : index
    %1 = vector.load %arg2[%c0_3, %c0_4, %c0_5, %c0_6] : memref<2x3x16x16xf32, #tpu.memory_space<vmem>>, vector<2x3x16x16xf32>
    %c0_7 = arith.constant 0 : index
    %c0_8 = arith.constant 0 : index
    %2 = vector.load %arg3[%c0_7, %c0_8] : memref<16x16xf32, #tpu.memory_space<vmem>>, vector<16x16xf32>
    %3 = vector.extract_strided_slice %0 {offsets = [0, 0, 0, 0], sizes = [2, 1, 16, 16], strides = [1, 1, 1, 1]} : vector<2x3x16x16xf32> to vector<2x1x16x16xf32>
    %4 = vector.shape_cast %3 : vector<2x1x16x16xf32> to vector<2x16x16xf32>
    %5 = vector.extract_strided_slice %1 {offsets = [0, 0, 0, 0], sizes = [2, 1, 16, 16], strides = [1, 1, 1, 1]} : vector<2x3x16x16xf32> to vector<2x1x16x16xf32>
    %6 = vector.shape_cast %5 : vector<2x1x16x16xf32> to vector<2x16x16xf32>
    %7 = arith.subf %4, %6 : vector<2x16x16xf32>
    %8 = math.absf %7 : vector<2x16x16xf32>
    %9 = vector.extract_strided_slice %0 {offsets = [0, 1, 0, 0], sizes = [2, 1, 16, 16], strides = [1, 1, 1, 1]} : vector<2x3x16x16xf32> to vector<2x1x16x16xf32>
    %10 = vector.shape_cast %9 : vector<2x1x16x16xf32> to vector<2x16x16xf32>
    %11 = vector.extract_strided_slice %1 {offsets = [0, 1, 0, 0], sizes = [2, 1, 16, 16], strides = [1, 1, 1, 1]} : vector<2x3x16x16xf32> to vector<2x1x16x16xf32>
    %12 = vector.shape_cast %11 : vector<2x1x16x16xf32> to vector<2x16x16xf32>
    %13 = arith.subf %10, %12 : vector<2x16x16xf32>
    %14 = math.absf %13 : vector<2x16x16xf32>
    %15 = arith.addf %8, %14 : vector<2x16x16xf32>
    %16 = vector.extract_strided_slice %0 {offsets = [0, 2, 0, 0], sizes = [2, 1, 16, 16], strides = [1, 1, 1, 1]} : vector<2x3x16x16xf32> to vector<2x1x16x16xf32>
    %17 = vector.shape_cast %16 : vector<2x1x16x16xf32> to vector<2x16x16xf32>
    %18 = vector.extract_strided_slice %1 {offsets = [0, 2, 0, 0], sizes = [2, 1, 16, 16], strides = [1, 1, 1, 1]} : vector<2x3x16x16xf32> to vector<2x1x16x16xf32>
    %19 = vector.shape_cast %18 : vector<2x1x16x16xf32> to vector<2x16x16xf32>
    %20 = arith.subf %17, %19 : vector<2x16x16xf32>
    %21 = math.absf %20 : vector<2x16x16xf32>
    %22 = arith.addf %15, %21 : vector<2x16x16xf32>
    %cst = arith.constant dense<0.000000e+00> : vector<16x16xf32>
    %23 = vector.multi_reduction <add>, %22, %cst [0] : vector<2x16x16xf32> to vector<16x16xf32>
    %24 = arith.mulf %23, %2 : vector<16x16xf32>
    %25 = vector.extract_strided_slice %1 {offsets = [0, 0, 0, 0], sizes = [2, 1, 16, 16], strides = [1, 1, 1, 1]} : vector<2x3x16x16xf32> to vector<2x1x16x16xf32>
    %26 = vector.shape_cast %25 : vector<2x1x16x16xf32> to vector<2x16x16xf32>
    %27 = vector.extract_strided_slice %1 {offsets = [0, 1, 0, 0], sizes = [2, 1, 16, 16], strides = [1, 1, 1, 1]} : vector<2x3x16x16xf32> to vector<2x1x16x16xf32>
    %28 = vector.shape_cast %27 : vector<2x1x16x16xf32> to vector<2x16x16xf32>
    %29 = vector.extract_strided_slice %1 {offsets = [0, 2, 1, 1], sizes = [2, 1, 14, 14], strides = [1, 1, 1, 1]} : vector<2x3x16x16xf32> to vector<2x1x14x14xf32>
    %30 = vector.shape_cast %29 : vector<2x1x14x14xf32> to vector<2x14x14xf32>
    %31 = vector.extract_strided_slice %28 {offsets = [0, 2, 1], sizes = [2, 14, 14], strides = [1, 1, 1]} : vector<2x16x16xf32> to vector<2x14x14xf32>
    %32 = vector.extract_strided_slice %28 {offsets = [0, 0, 1], sizes = [2, 14, 14], strides = [1, 1, 1]} : vector<2x16x16xf32> to vector<2x14x14xf32>
    %33 = arith.subf %31, %32 : vector<2x14x14xf32>
    %34 = vector.extract_strided_slice %26 {offsets = [0, 1, 2], sizes = [2, 14, 14], strides = [1, 1, 1]} : vector<2x16x16xf32> to vector<2x14x14xf32>
    %35 = vector.extract_strided_slice %26 {offsets = [0, 1, 0], sizes = [2, 14, 14], strides = [1, 1, 1]} : vector<2x16x16xf32> to vector<2x14x14xf32>
    %36 = arith.subf %34, %35 : vector<2x14x14xf32>
    %37 = arith.addf %36, %33 : vector<2x14x14xf32>
    %cst_9 = arith.constant 3.000000e-02 : f32
    %38 = vector.broadcast %cst_9 : f32 to vector<2x14x14xf32>
    %39 = arith.cmpf ogt, %37, %38 : vector<2x14x14xf32>
    %cst_10 = arith.constant 1.000000e-01 : f32
    %40 = vector.broadcast %cst_10 : f32 to vector<2x14x14xf32>
    %41 = arith.cmpf ogt, %30, %40 : vector<2x14x14xf32>
    %42 = arith.andi %39, %41 : vector<2x14x14xi1>
    %43 = arith.mulf %37, %30 : vector<2x14x14xf32>
    %cst_11 = arith.constant 0.000000e+00 : f32
    %44 = vector.broadcast %cst_11 : f32 to vector<2x14x14xf32>
    %45 = arith.select %42, %43, %44 : vector<2x14x14xi1>, vector<2x14x14xf32>
    %cst_12 = arith.constant dense<0.000000e+00> : vector<14x14xf32>
    %46 = vector.multi_reduction <add>, %45, %cst_12 [0] : vector<2x14x14xf32> to vector<14x14xf32>
    %47 = vector.shape_cast %46 : vector<14x14xf32> to vector<1x14x14xf32>
    %cst_13 = arith.constant dense<0.000000e+00> : vector<1xf32>
    %48 = vector.multi_reduction <add>, %47, %cst_13 [1, 2] : vector<1x14x14xf32> to vector<1xf32>
    %49 = vector.shape_cast %48 : vector<1xf32> to vector<1x1x1xf32>
    %50 = vector.extract %49[0, 0, 0] : f32 from vector<1x1x1xf32>
    %51 = vector.extract_strided_slice %24 {offsets = [0, 0], sizes = [8, 16], strides = [1, 1]} : vector<16x16xf32> to vector<8x16xf32>
    %52 = vector.extract_strided_slice %24 {offsets = [8, 0], sizes = [8, 16], strides = [1, 1]} : vector<16x16xf32> to vector<8x16xf32>
    %53 = arith.addf %51, %52 : vector<8x16xf32>
    %54 = tpu.iota {dimensions = array<i32: 0>} : vector<8x16xi32>
    %55 = tpu.iota {dimensions = array<i32: 1>} : vector<8x16xi32>
    %c0_i32 = arith.constant 0 : i32
    %56 = vector.broadcast %c0_i32 : i32 to vector<8x16xi32>
    %57 = arith.cmpi eq, %54, %56 : vector<8x16xi32>
    %c0_i32_14 = arith.constant 0 : i32
    %58 = vector.broadcast %c0_i32_14 : i32 to vector<8x16xi32>
    %59 = arith.cmpi eq, %55, %58 : vector<8x16xi32>
    %60 = arith.andi %57, %59 : vector<8x16xi1>
    %cst_15 = arith.constant 1.000000e+01 : f32
    %61 = arith.mulf %cst_15, %50 : f32
    %cst_16 = arith.constant 0.000000e+00 : f32
    %62 = vector.broadcast %61 : f32 to vector<8x16xf32>
    %63 = vector.broadcast %cst_16 : f32 to vector<8x16xf32>
    %64 = arith.select %60, %62, %63 : vector<8x16xi1>, vector<8x16xf32>
    %65 = arith.addf %53, %64 : vector<8x16xf32>
    %c0_17 = arith.constant 0 : index
    %c0_18 = arith.constant 0 : index
    %c0_19 = arith.constant 0 : index
    %66 = vector.load %arg4[%c0_17, %c0_18, %c0_19] : memref<1x8x16xf32, #tpu.memory_space<vmem>>, vector<1x8x16xf32>
    %67 = vector.shape_cast %66 : vector<1x8x16xf32> to vector<8x16xf32>
    %68 = vector.shape_cast %65 : vector<8x16xf32> to vector<1x8x16xf32>
    tpu.vector_store %arg4[%c0_17, %c0_18, %c0_19], %68 {strides = array<i32>} : memref<1x8x16xf32, #tpu.memory_space<vmem>>, vector<1x8x16xf32>,
    return
  }
  func.func @transform_0(%arg0: i32) -> (i32, i32, i32, i32) {
    %c0_i32 = arith.constant 0 : i32
    %c0_i32_0 = arith.constant 0 : i32
    %c0_i32_1 = arith.constant 0 : i32
    %c0_i32_2 = arith.constant 0 : i32
    return %arg0, %c0_i32, %c0_i32_0, %c0_i32_1 : i32, i32, i32, i32
  }
  func.func @transform_1(%arg0: i32) -> (i32, i32, i32, i32) {
    %c0_i32 = arith.constant 0 : i32
    %c0_i32_0 = arith.constant 0 : i32
    %c0_i32_1 = arith.constant 0 : i32
    %c0_i32_2 = arith.constant 0 : i32
    return %arg0, %c0_i32, %c0_i32_0, %c0_i32_1 : i32, i32, i32, i32
  }
  func.func @transform_2(%arg0: i32) -> (i32, i32) {
    %c0_i32 = arith.constant 0 : i32
    %c0_i32_0 = arith.constant 0 : i32
    %c0_i32_1 = arith.constant 0 : i32
    return %c0_i32, %c0_i32_0 : i32, i32
  }
  func.func @transform_3(%arg0: i32) -> (i32, i32, i32) {
    %c0_i32 = arith.constant 0 : i32
    %c0_i32_0 = arith.constant 0 : i32
    %c0_i32_1 = arith.constant 0 : i32
    return %arg0, %c0_i32, %c0_i32_0 : i32, i32, i32
  }
}

</mosaic_0001>

<llo_original>
// kernel: physics_loss.1
$region0: #{physics_loss.1}
  #allocation0 [shape = 'u32[]', space=smem, size = 0x4, offset = 0x4, fixed_abs, tag = 'smem constant byte address 0x4 - core index']
  #allocation1 [shape = 'u32[144,128]{1,0:T(1,128)}', space=vmem, size = 0x12000, scoped, tag = 'internal scratch']
  %s0 = inlined_call_operand.hbm [shape: f32[2,3,16,16], index: 0, kind: input, shape index: {}]
  %s1 = inlined_call_operand.hbm [shape: f32[2,3,16,16], index: 1, kind: input, shape index: {}]
  %s2 = inlined_call_operand.vmem [shape: f32[16,16], index: 2, kind: input, shape index: {}]
  %s3 = inlined_call_operand.vmem [shape: f32[1,8,16], index: 3, kind: output, shape index: {}]
  %s4 = sld [smem:[#allocation0]]
  $region30: #{physics_loss.1} parent=0
    _
  %s6 = ssub.s32 1, %s4
  %s7 = scalar_select 0, %s6, %s4
  $region1: #{physics_loss.1} parent=0
    #allocation2 [shape = 'u8[49152]{0}', space=vmem, size = 0xc000, scoped, tag = 'input window, operand 0, single buffered']
    #allocation3 [shape = 's32[1]{0}', space=sflag, size = 0x4, scoped, tag = 'scoped memory for physics_loss.1']
    #allocation4 [shape = 'u8[49152]{0}', space=vmem, size = 0xc000, scoped, tag = 'input window, operand 1, single buffered']
    #allocation5 [shape = 's32[1]{0}', space=sflag, size = 0x4, scoped, tag = 'scoped memory for physics_loss.1']
    %8 = vsyncpa [#allocation3], 0
    %9 = vsyncpa [#allocation5], 0
    // Predicated region
    $region2: #{physics_loss.1} parent=1 // pred_check
      _
    $region3: #{physics_loss.1} parent=1 // pred_check_branch
      %11 = sbr.rel (0) target = $region5
    $region4: #{physics_loss.1} parent=1 // pred_region
      %s13 = ssub.s32 1536, 1536
      %14 = vsyncadd [#allocation3], %s13
      %s15 = sshll.u32 [#allocation2], 4
      %s16 = int_to_ptr.vmem [resolvable:$true] %s15
      %21 = dma.hbm_to_vmem [thread:$0]  %s0, 1536, %s16, [#allocation3], 128, 128, 8
    $region5: #{physics_loss.1} parent=1 // pred_fallthru
      _
    // Predicated region
    $region6: #{physics_loss.1} parent=1 // pred_check
      _
    $region7: #{physics_loss.1} parent=1 // pred_check_branch
      %23 = sbr.rel (0) target = $region9
    $region8: #{physics_loss.1} parent=1 // pred_region
      %s25 = ssub.s32 1536, 1536
      %26 = vsyncadd [#allocation5], %s25
      %s27 = sshll.u32 [#allocation4], 4
      %s28 = int_to_ptr.vmem [resolvable:$true] %s27
      %33 = dma.hbm_to_vmem [thread:$0]  %s1, 1536, %s28, [#allocation5], 128, 128, 8
    $region9: #{physics_loss.1} parent=1 // pred_fallthru
      _
    // Predicated region
    $region10: #{physics_loss.1} parent=1 // pred_check
      _
    $region11: #{physics_loss.1} parent=1 // pred_check_branch
      %35 = sbr.rel (0) target = $region13
    $region12: #{physics_loss.1} parent=1 // pred_region
      _
    $region13: #{physics_loss.1} parent=1 // pred_fallthru
      _
    // Predicated region
    $region14: #{physics_loss.1} parent=1 // pred_check
      _
    $region15: #{physics_loss.1} parent=1 // pred_check_branch
      %37 = sbr.rel (0) target = $region17
    $region16: #{physics_loss.1} parent=1 // pred_region
      %38 = dma.done [#allocation3], 1536
    $region17: #{physics_loss.1} parent=1 // pred_fallthru
      _
    // Predicated region
    $region18: #{physics_loss.1} parent=1 // pred_check
      _
    $region19: #{physics_loss.1} parent=1 // pred_check_branch
      %40 = sbr.rel (0) target = $region21
    $region20: #{physics_loss.1} parent=1 // pred_region
      %41 = dma.done [#allocation5], 1536
    $region21: #{physics_loss.1} parent=1 // pred_fallthru
      _
    %v42 = vld [vmem:[#allocation2] sm:$0xff]
    %v43 = vld [vmem:[#allocation2 + $0x8] sm:$0xff]
    %v44 = vld [vmem:[#allocation2 + $0x10] sm:$0xff]
    %v45 = vld [vmem:[#allocation2 + $0x18] sm:$0xff]
    %v46 = vld [vmem:[#allocation2 + $0x20] sm:$0xff]
    %v47 = vld [vmem:[#allocation2 + $0x28] sm:$0xff]
    %v48 = vld [vmem:[#allocation2 + $0x30] sm:$0xff]
    %v49 = vld [vmem:[#allocation2 + $0x38] sm:$0xff]
    %v50 = vld [vmem:[#allocation2 + $0x40] sm:$0xff]
    %v51 = vld [vmem:[#allocation2 + $0x48] sm:$0xff]
    %v52 = vld [vmem:[#allocation2 + $0x50] sm:$0xff]
    %v53 = vld [vmem:[#allocation2 + $0x58] sm:$0xff]
    %v54 = vld [vmem:[#allocation4] sm:$0xff]
    %v55 = vld [vmem:[#allocation4 + $0x8] sm:$0xff]
    %v56 = vld [vmem:[#allocation4 + $0x10] sm:$0xff]
    %v57 = vld [vmem:[#allocation4 + $0x18] sm:$0xff]
    %v58 = vld [vmem:[#allocation4 + $0x20] sm:$0xff]
    %v59 = vld [vmem:[#allocation4 + $0x28] sm:$0xff]
    %v60 = vld [vmem:[#allocation4 + $0x30] sm:$0xff]
    %v61 = vld [vmem:[#allocation4 + $0x38] sm:$0xff]
    %v62 = vld [vmem:[#allocation4 + $0x40] sm:$0xff]
    %v63 = vld [vmem:[#allocation4 + $0x48] sm:$0xff]
    %v64 = vld [vmem:[#allocation4 + $0x50] sm:$0xff]
    %v65 = vld [vmem:[#allocation4 + $0x58] sm:$0xff]
    %v66 = vld [vmem:[%s2] sm:$0xff]
    %v67 = vld [vmem:[%s2 + $0x8] sm:$0xff]
    %v68 = vsub.f32 %v42, %v54
    %v69 = vsub.f32 %v43, %v55
    %v70 = vsub.f32 %v48, %v60
    %v71 = vsub.f32 %v49, %v61
    %v72 = vand.u32 2147483647, %v68
    %v73 = vand.u32 2147483647, %v69
    %v74 = vand.u32 2147483647, %v70
    %v75 = vand.u32 2147483647, %v71
    %v76 = vsub.f32 %v44, %v56
    %v77 = vsub.f32 %v45, %v57
    %v78 = vsub.f32 %v50, %v62
    %v79 = vsub.f32 %v51, %v63
    %v80 = vand.u32 2147483647, %v76
    %v81 = vand.u32 2147483647, %v77
    %v82 = vand.u32 2147483647, %v78
    %v83 = vand.u32 2147483647, %v79
    %v84 = vadd.f32 %v72, %v80
    %v85 = vadd.f32 %v73, %v81
    %v86 = vadd.f32 %v74, %v82
    %v87 = vadd.f32 %v75, %v83
    %v88 = vsub.f32 %v46, %v58
    %v89 = vsub.f32 %v47, %v59
    %v90 = vsub.f32 %v52, %v64
    %v91 = vsub.f32 %v53, %v65
    %v92 = vand.u32 2147483647, %v88
    %v93 = vand.u32 2147483647, %v89
    %v94 = vand.u32 2147483647, %v90
    %v95 = vand.u32 2147483647, %v91
    %v96 = vadd.f32 %v84, %v92
    %v97 = vadd.f32 %v85, %v93
    %v98 = vadd.f32 %v86, %v94
    %v99 = vadd.f32 %v87, %v95
    %vm100 = vcmask 130048
    %v101 = vsel %vm100, %v96, 0.0
    %v102 = vsel %vm100, %v98, 0.0
    %v103 = vadd.f32 %v101, %v102
    %v104 = vsel %vm100, %v97, 0.0
    %v105 = vsel %vm100, %v99, 0.0
    %v106 = vadd.f32 %v104, %v105
    %v107 = vmul.f32 %v103, %v66
    %v108 = vmul.f32 %v106, %v67
    %vm113 = vcmask 1041408
    %v114 = vrot.slane %v56, 6
    %v115 = vrot.slane %v57, 6
    %v116 = vsel %vm113, %v114, %v115
    %v117 = vrot.slane %v62, 6
    %v118 = vrot.slane %v63, 6
    %v119 = vsel %vm113, %v117, %v118
    %v124 = vsub.f32 %v56, %v114
    %v125 = vsub.f32 %v57, %v116
    %v126 = vsub.f32 %v62, %v117
    %v127 = vsub.f32 %v63, %v119
    %132 = vrot.lane.b32.xlu0 %v54, 2
    %v133 = vpop.permute.xlu0 %132
    %134 = vrot.lane.b32.xlu0 %v55, 2
    %v135 = vpop.permute.xlu0 %134
    %136 = vrot.lane.b32.xlu0 %v60, 2
    %v137 = vpop.permute.xlu0 %136
    %138 = vrot.lane.b32.xlu0 %v61, 2
    %v139 = vpop.permute.xlu0 %138
    %v144 = vsub.f32 %v54, %v133
    %v145 = vsub.f32 %v55, %v135
    %v146 = vsub.f32 %v60, %v137
    %v147 = vsub.f32 %v61, %v139
    %vm152 = vcmask 1046528
    %v153 = vrot.slane %v124, 1
    %v154 = vrot.slane %v125, 1
    %v155 = vsel %vm152, %v153, %v154
    %v156 = vrot.slane %v126, 1
    %v157 = vrot.slane %v127, 1
    %v158 = vsel %vm152, %v156, %v157
    %159 = vrot.lane.b32.xlu0 %v155, 1
    %v160 = vpop.permute.xlu0 %159
    %161 = vrot.lane.b32.xlu0 %v154, 1
    %v162 = vpop.permute.xlu0 %161
    %163 = vrot.lane.b32.xlu0 %v158, 1
    %v164 = vpop.permute.xlu0 %163
    %165 = vrot.lane.b32.xlu0 %v157, 1
    %v166 = vpop.permute.xlu0 %165
    %v171 = vadd.f32 %v144, %v160
    %v172 = vadd.f32 %v145, %v162
    %v173 = vadd.f32 %v146, %v164
    %v174 = vadd.f32 %v147, %v166
    %vm175 = vcmp.gt.f32.partialorder %v171, 0.03
    %vm176 = vcmp.gt.f32.partialorder %v172, 0.03
    %vm177 = vcmp.gt.f32.partialorder %v173, 0.03
    %vm178 = vcmp.gt.f32.partialorder %v174, 0.03
    %vm179 = vcmp.gt.f32.partialorder %v58, 0.1
    %vm180 = vcmp.gt.f32.partialorder %v59, 0.1
    %vm181 = vcmp.gt.f32.partialorder %v64, 0.1
    %vm182 = vcmp.gt.f32.partialorder %v65, 0.1
    %v183 = vsel %vm179, 1, 0
    %v184 = vsel %vm180, 1, 0
    %v185 = vsel %vm181, 1, 0
    %v186 = vsel %vm182, 1, 0
    %187 = vrot.lane.b32.xlu0 %v183, 1
    %v188 = vpop.permute.xlu0 %187
    %189 = vrot.lane.b32.xlu0 %v184, 1
    %v190 = vpop.permute.xlu0 %189
    %191 = vrot.lane.b32.xlu0 %v185, 1
    %v192 = vpop.permute.xlu0 %191
    %193 = vrot.lane.b32.xlu0 %v186, 1
    %v194 = vpop.permute.xlu0 %193
    %vm195 = vcmp.ne.s32.totalorder %v188, 0
    %vm196 = vcmp.ne.s32.totalorder %v190, 0
    %vm197 = vcmp.ne.s32.totalorder %v192, 0
    %vm198 = vcmp.ne.s32.totalorder %v194, 0
    %vm199 = vmand %vm175, %vm195
    %vm200 = vmand %vm176, %vm196
    %vm201 = vmand %vm177, %vm197
    %vm202 = vmand %vm178, %vm198
    %207 = vrot.lane.b32.xlu0 %v58, 1
    %v208 = vpop.permute.xlu0 %207
    %209 = vrot.lane.b32.xlu0 %v59, 1
    %v210 = vpop.permute.xlu0 %209
    %211 = vrot.lane.b32.xlu0 %v64, 1
    %v212 = vpop.permute.xlu0 %211
    %213 = vrot.lane.b32.xlu0 %v65, 1
    %v214 = vpop.permute.xlu0 %213
    %v219 = vmul.f32 %v171, %v208
    %v220 = vmul.f32 %v172, %v210
    %v221 = vmul.f32 %v173, %v212
    %v222 = vmul.f32 %v174, %v214
    %v223 = vsel %vm199, %v219, 0.0
    %v224 = vsel %vm200, %v220, 0.0
    %v225 = vsel %vm201, %v221, 0.0
    %v226 = vsel %vm202, %v222, 0.0
    %vm227 = vcmask 130065
    %v228 = vsel %vm227, %v223, 0.0
    %v229 = vsel %vm227, %v225, 0.0
    %v230 = vadd.f32 %v228, %v229
    %vm231 = vcmask 129040
    %v232 = vsel %vm231, %v224, 0.0
    %v233 = vsel %vm231, %v226, 0.0
    %v234 = vadd.f32 %v232, %v233
    %v237 = vrot.slane %v230, 1
    %v238 = vrot.slane %v234, 1
    %v239 = vsel %vm152, %v237, %v238
    %240 = vrot.lane.b32.xlu0 %v239, 126
    %v241 = vpop.permute.xlu0 %240
    %242 = vrot.lane.b32.xlu0 %v238, 126
    %v243 = vpop.permute.xlu0 %242
    %vm246 = vcmask 113664
    %v247 = vsel %vm246, %v241, 0.0
    %vm248 = vcmask 111616
    %v249 = vsel %vm248, %v243, 0.0
    %v250 = vadd.f32 %v247, %v249
    %251 = vadd.xlane.f32.xlu0 %v250
    %v252 = vpop.xlane.xlu0 %251
    %v253 = vrot.slane %v252, 4
    %v254 = vadd.f32 %v252, %v253
    %v255 = vrot.slane %v254, 2
    %v256 = vadd.f32 %v254, %v255
    %v257 = vrot.slane %v256, 1
    %v258 = vadd.f32 %v256, %v257
    %s259 = vtos %v258
    %v260 = vadd.f32 %v107, %v108
    %v261 = vlaneseq
    %v262 = vshrl.u32 %v261, 7
    %v263 = vlaneseq
    %v264 = vand.u32 %v263, 127
    %vm265 = vcmp.eq.s32.totalorder %v262, 0
    %vm266 = vcmp.eq.s32.totalorder %v264, 0
    %vm267 = vmand %vm265, %vm266
    %s268 = smul.f32 %s259, 10.0
    %v269 = vstv %s268
    %v270 = vsel %vm267, %v269, 0.0
    %v271 = vadd.f32 %v260, %v270
    %272 = vst.msk [vmem:[%s3] sm:$0xff] %vm100, %v271
    // Predicated region
    $region22: #{physics_loss.1} parent=1 // pred_check
      _
    $region23: #{physics_loss.1} parent=1 // pred_check_branch
      %274 = sbr.rel (0) target = $region25
    $region24: #{physics_loss.1} parent=1 // pred_region
      _
    $region25: #{physics_loss.1} parent=1 // pred_fallthru
      _
    // Predicated region
    $region26: #{physics_loss.1} parent=1 // pred_check
      _
    $region27: #{physics_loss.1} parent=1 // pred_check_branch
      %276 = sbr.rel (0) target = $region29
    $region28: #{physics_loss.1} parent=1 // pred_region
      _
    $region29: #{physics_loss.1} parent=1 // pred_fallthru
      _
    %277 = vsyncpa [#allocation3], 1
    %278 = vsyncpa [#allocation5], 1

</llo_original>
